<compile_context>
chip_gen: v7x
topology: tpu7x:2x2x1
jax: 0.10.0
libtpu: 0.0.40
codegen_flags: <defaults>
</compile_context>

<pallas_src>
import functools

import jax
import jax.numpy as jnp
from jax.experimental import pallas as pl
from jax.experimental.pallas import tpu as pltpu

_EPS = 1e-6
_MAX_TILE_ROWS = 8192


def _round_up(x, m):
    return ((x + m - 1) // m) * m


def _tpu_generation_info():
    """Best-effort (vmem_capacity_bytes, num_tensorcores_per_chip)."""
    vmem_cap = None
    num_cores = 1
    try:
        info = pltpu.get_tpu_info()
        vmem_cap = getattr(info, "vmem_capacity_bytes", None)
    except Exception:
        pass
    try:
        kind = jax.devices()[0].device_kind.lower()
        if "v7" in kind or "7x" in kind:   # v7x: 2 TensorCores per chip
            num_cores = 2
    except Exception:
        pass
    return vmem_cap, num_cores


def _pick_tile_r(rows, cols, itemsize, align, budget, splits):
    # Per-row VMEM cost: 2 inputs x 2 double-buffers (input dtype) + ~4 f32-wide
    # temporaries (x_f32, y_f32, products) materialized by the cast/compute.
    per_row = 4 * cols * itemsize + 16 * cols
    t = budget // max(per_row, 1)
    t = max(align, min(int(t), _MAX_TILE_ROWS))
    t = (t // align) * align
    t = min(t, _round_up(pl.cdiv(rows, splits), align))
    return max(t, align)


def _cos_loss_kernel(pred_ref, emd_ref, partial_ref, *, d, k, tile_r,
                     tiles_per_split, valid_rows):
    c = pl.program_id(0)   # core split (core-parallel on v7x, size 1 otherwise)
    i = pl.program_id(1)   # tile within split (reduction axis, "arbitrary")

    # Per-split accumulator lives in the resident output block (same block for all i).
    @pl.when(i == 0)
    def _():
        partial_ref[...] = jnp.zeros_like(partial_ref)

    x = pred_ref[...].astype(jnp.float32)   # (tile_r, k*d)
    y = emd_ref[...].astype(jnp.float32)

    # Validity of each (possibly packed) row: discards both batch-tail rows and the
    # undefined data of the partial trailing block (hard select, NaN-safe).
    t = c * tiles_per_split + i
    rows = t * tile_r + jax.lax.broadcasted_iota(jnp.int32, (tile_r, 1), 0)
    valid = rows < valid_rows

    tile_sum = jnp.zeros((), jnp.float32)
    for j in range(k):                      # static unroll; k == 1 unless D is packed
        xs = x[:, j * d:(j + 1) * d]
        ys = y[:, j * d:(j + 1) * d]
        s_pp = jnp.sum(xs * xs, axis=-1, keepdims=True)   # ||pred||^2
        s_ee = jnp.sum(ys * ys, axis=-1, keepdims=True)   # ||emd||^2
        s_pe = jnp.sum(xs * ys, axis=-1, keepdims=True)   # <pred, emd>
        # a = pred/||pred||  =>  <a,emd> = s_pe * rsqrt(s_pp), ||a||^2 == 1, so the
        # CosineSimilarity clamp max(||a||^2*||emd||^2, eps^2) == max(s_ee, eps^2).
        w12 = s_pe * jax.lax.rsqrt(s_pp)
        cos = w12 * jax.lax.rsqrt(jnp.maximum(s_ee, _EPS * _EPS))
        tile_sum = tile_sum + jnp.sum(jnp.where(valid, 1.0 - cos, 0.0))

    partial_ref[...] += tile_sum
    # Final mean (/B) and cross-split combine happen in the wrapper.


def cosine_text_loss(text_pred, text_emd):
    """Pallas entry point. text_pred, text_emd: [B, D] (f32 or bf16)."""
    assert text_pred.shape == text_emd.shape, (text_pred.shape, text_emd.shape)
    b, d = text_pred.shape
    itemsize = jnp.dtype(text_pred.dtype).itemsize

    # Lane-dense packing for small D: view [B, D] as [B/k, k*D] (free reshape).
    k = 1
    if d < 128 and 128 % d == 0 and b % (128 // d) == 0:
        k = 128 // d
    rows = b // k
    cols = k * d
    if k > 1:
        text_pred = text_pred.reshape(rows, cols)
        text_emd = text_emd.reshape(rows, cols)

    align = max(8, 32 // itemsize)          # 8 f32 / 16 bf16 / 32 int8-fp8
    vmem_cap, num_cores = _tpu_generation_info()
    splits = 2 if num_cores >= 2 else 1

    # Generation-aware working-set budget: 24 MiB on 64-MiB-VMEM chips (v7x),
    # 48 MiB on 128-MiB-VMEM chips (v5e/v6e).
    if vmem_cap is None or vmem_cap <= (80 << 20):
        budget = 24 << 20
    else:
        budget = 48 << 20

    tile_r = _pick_tile_r(rows, cols, itemsize, align, budget, splits)
    tiles_per_split = pl.cdiv(rows, splits * tile_r)
    # Never generate a fully out-of-bounds trailing block: fall back to one split.
    if splits > 1 and (splits * tiles_per_split - 1) * tile_r >= rows:
        splits = 1
        tile_r = min(tile_r, _round_up(rows, align))
        tiles_per_split = pl.cdiv(rows, tile_r)

    kernel = functools.partial(
        _cos_loss_kernel, d=d, k=k, tile_r=tile_r,
        tiles_per_split=tiles_per_split, valid_rows=rows,
    )
    in_map = lambda c, i: (c * tiles_per_split + i, 0)

    # VMEM limit: double-buffered inputs + f32 cast/product temporaries + headroom.
    work = 2 * 2 * tile_r * cols * itemsize
    temps = 4 * tile_r * cols * 4
    vmem_limit = int(1.5 * (work + temps)) + (4 << 20)
    vmem_limit = max(vmem_limit, 16 << 20)
    cap = (vmem_cap - (8 << 20)) if vmem_cap else (100 << 20)
    vmem_limit = int(min(vmem_limit, cap))

    if splits > 1:
        core_par = getattr(pltpu, "CORE_PARALLEL", None)
        if core_par is not None:
            dim_sems = (core_par, pltpu.ARBITRARY)
        else:
            dim_sems = ("parallel", "arbitrary")
    else:
        dim_sems = ("arbitrary", "arbitrary")

    partials = pl.pallas_call(
        kernel,
        out_shape=jax.ShapeDtypeStruct((splits, 8, 128), jnp.float32),
        grid=(splits, tiles_per_split),
        in_specs=[
            pl.BlockSpec((tile_r, cols), in_map),
            pl.BlockSpec((tile_r, cols), in_map),
        ],
        out_specs=pl.BlockSpec((1, 8, 128), lambda c, i: (c, 0, 0)),
        compiler_params=pltpu.CompilerParams(
            dimension_semantics=dim_sems,
            vmem_limit_bytes=vmem_limit,
        ),
        cost_estimate=pl.CostEstimate(
            flops=6 * b * d,
            transcendentals=2 * b,
            bytes_accessed=2 * b * d * itemsize + splits * 8 * 128 * 4,
        ),
    )(text_pred, text_emd)

    # Cheap combine of per-split partial sums; mean over the true batch size.
    return jnp.sum(partials[:, 0, 0]) * (1.0 / b)


def loss_calculator_forward(batch_data, batch_output):
    """Mirrors LossCalculator.forward(batch_data, batch_output)."""
    text_loss = cosine_text_loss(batch_output["text_pred"], batch_output["text_emd"])
    total_loss = text_loss
    return total_loss, {"text_loss": text_loss}


if __name__ == "__main__":
    key = jax.random.PRNGKey(0)
    k1, k2 = jax.random.split(key)
    B, D = 8, 32  # small [batch, hidden] feature embeddings
    text_pred = jax.random.normal(k1, (B, D), dtype=jnp.float32)
    text_emd = jax.random.normal(k2, (B, D), dtype=jnp.float32)

    batch_data = {}  # unused by forward, matches module signature
    batch_output = {"text_pred": text_pred, "text_emd": text_emd}

    total_loss, loss_dict = loss_calculator_forward(batch_data, batch_output)
    total_loss = jax.block_until_ready(total_loss)

    # Pure-JAX reference (un-simplified formula, mirrors the torch module).
    a = text_pred / jnp.linalg.norm(text_pred, axis=-1, keepdims=True)
    w12 = jnp.sum(a * text_emd, axis=-1)
    w1 = jnp.sum(a * a, axis=-1)
    w2 = jnp.sum(text_emd * text_emd, axis=-1)
    cos = w12 / jnp.sqrt(jnp.maximum(w1 * w2, _EPS * _EPS))
    ref = jnp.mean(1.0 - cos)

    assert jnp.allclose(total_loss, ref, atol=1e-5), (total_loss, ref)
    assert jnp.allclose(loss_dict["text_loss"], total_loss)
    print("KERNEL_OK")
</pallas_src>

<mosaic_0001>
module attributes {stable_mosaic.version = 11 : i64} {
  func.func @_cos_loss_kernel(%arg0: i32, %arg1: i32, %arg2: memref<8x128xf32, #tpu.memory_space<vmem>>, %arg3: memref<8x128xf32, #tpu.memory_space<vmem>>, %arg4: memref<1x8x128xf32, #tpu.memory_space<vmem>>) attributes {dimension_semantics = [#tpu.dimension_semantics<arbitrary>, #tpu.dimension_semantics<arbitrary>], iteration_bounds = array<i64: 1, 1>, scalar_prefetch = 0 : i64, scratch_operands = 0 : i64, tpu.core_type = #tpu.core_type<tc>, window_params = [{transform_indices = @transform_0, window_bounds = array<i64: 8, 128>}, {transform_indices = @transform_1, window_bounds = array<i64: 8, 128>}, {transform_indices = @transform_2, window_bounds = array<i64: 1, 8, 128>}]} {
    %c0_i32 = arith.constant 0 : i32
    %0 = arith.cmpi eq, %arg1, %c0_i32 : i32
    %1 = arith.extui %0 : i1 to i32
    %c0_i32_0 = arith.constant 0 : i32
    %2 = arith.cmpi ne, %1, %c0_i32_0 : i32
    scf.if %2 {
      %cst_38 = arith.constant 0.000000e+00 : f32
      %121 = vector.broadcast %cst_38 : f32 to vector<1x8x128xf32>
      %c0_39 = arith.constant 0 : index
      %c0_40 = arith.constant 0 : index
      %c0_41 = arith.constant 0 : index
      %122 = vector.load %arg4[%c0_39, %c0_40, %c0_41] : memref<1x8x128xf32, #tpu.memory_space<vmem>>, vector<1x8x128xf32>
      tpu.vector_store %arg4[%c0_39, %c0_40, %c0_41], %121 {strides = array<i32>} : memref<1x8x128xf32, #tpu.memory_space<vmem>>, vector<1x8x128xf32>,
    } else {
    }
    %c0 = arith.constant 0 : index
    %c0_1 = arith.constant 0 : index
    %3 = vector.load %arg2[%c0, %c0_1] : memref<8x128xf32, #tpu.memory_space<vmem>>, vector<8x128xf32>
    %c0_2 = arith.constant 0 : index
    %c0_3 = arith.constant 0 : index
    %4 = vector.load %arg3[%c0_2, %c0_3] : memref<8x128xf32, #tpu.memory_space<vmem>>, vector<8x128xf32>
    %c1_i32 = arith.constant 1 : i32
    %5 = arith.muli %arg0, %c1_i32 : i32
    %6 = arith.addi %5, %arg1 : i32
    %c8_i32 = arith.constant 8 : i32
    %7 = arith.muli %6, %c8_i32 : i32
    %8 = tpu.iota {dimensions = array<i32: 0>} : vector<8x1xi32>
    %9 = vector.broadcast %7 : i32 to vector<8x1xi32>
    %10 = arith.addi %9, %8 : vector<8x1xi32>
    %c2_i32 = arith.constant 2 : i32
    %11 = vector.broadcast %c2_i32 : i32 to vector<8x1xi32>
    %12 = arith.cmpi slt, %10, %11 : vector<8x1xi32>
    %13 = vector.extract_strided_slice %3 {offsets = [0, 0], sizes = [8, 32], strides = [1, 1]} : vector<8x128xf32> to vector<8x32xf32>
    %14 = vector.extract_strided_slice %4 {offsets = [0, 0], sizes = [8, 32], strides = [1, 1]} : vector<8x128xf32> to vector<8x32xf32>
    %15 = arith.mulf %13, %13 : vector<8x32xf32>
    %cst = arith.constant dense<0.000000e+00> : vector<8xf32>
    %16 = vector.multi_reduction <add>, %15, %cst [1] : vector<8x32xf32> to vector<8xf32>
    %17 = vector.shape_cast %16 : vector<8xf32> to vector<8x1xf32>
    %18 = arith.mulf %14, %14 : vector<8x32xf32>
    %cst_4 = arith.constant dense<0.000000e+00> : vector<8xf32>
    %19 = vector.multi_reduction <add>, %18, %cst_4 [1] : vector<8x32xf32> to vector<8xf32>
    %20 = vector.shape_cast %19 : vector<8xf32> to vector<8x1xf32>
    %21 = arith.mulf %13, %14 : vector<8x32xf32>
    %cst_5 = arith.constant dense<0.000000e+00> : vector<8xf32>
    %22 = vector.multi_reduction <add>, %21, %cst_5 [1] : vector<8x32xf32> to vector<8xf32>
    %23 = vector.shape_cast %22 : vector<8xf32> to vector<8x1xf32>
    %24 = math.rsqrt %17 : vector<8x1xf32>
    %25 = arith.mulf %23, %24 : vector<8x1xf32>
    %cst_6 = arith.constant 9.99999996E-13 : f32
    %26 = vector.broadcast %cst_6 : f32 to vector<8x1xf32>
    %27 = arith.maximumf %20, %26 : vector<8x1xf32>
    %28 = math.rsqrt %27 : vector<8x1xf32>
    %29 = arith.mulf %25, %28 : vector<8x1xf32>
    %cst_7 = arith.constant 1.000000e+00 : f32
    %30 = vector.broadcast %cst_7 : f32 to vector<8x1xf32>
    %31 = arith.subf %30, %29 : vector<8x1xf32>
    %cst_8 = arith.constant 0.000000e+00 : f32
    %32 = vector.broadcast %cst_8 : f32 to vector<8x1xf32>
    %33 = arith.select %12, %31, %32 : vector<8x1xi1>, vector<8x1xf32>
    %34 = vector.shape_cast %33 : vector<8x1xf32> to vector<1x8x1xf32>
    %cst_9 = arith.constant dense<0.000000e+00> : vector<1xf32>
    %35 = vector.multi_reduction <add>, %34, %cst_9 [1, 2] : vector<1x8x1xf32> to vector<1xf32>
    %36 = vector.shape_cast %35 : vector<1xf32> to vector<1x1x1xf32>
    %37 = vector.extract %36[0, 0, 0] : f32 from vector<1x1x1xf32>
    %cst_10 = arith.constant 0.000000e+00 : f32
    %38 = arith.addf %cst_10, %37 : f32
    %39 = vector.extract_strided_slice %3 {offsets = [0, 32], sizes = [8, 32], strides = [1, 1]} : vector<8x128xf32> to vector<8x32xf32>
    %40 = vector.extract_strided_slice %4 {offsets = [0, 32], sizes = [8, 32], strides = [1, 1]} : vector<8x128xf32> to vector<8x32xf32>
    %41 = arith.mulf %39, %39 : vector<8x32xf32>
    %cst_11 = arith.constant dense<0.000000e+00> : vector<8xf32>
    %42 = vector.multi_reduction <add>, %41, %cst_11 [1] : vector<8x32xf32> to vector<8xf32>
    %43 = vector.shape_cast %42 : vector<8xf32> to vector<8x1xf32>
    %44 = arith.mulf %40, %40 : vector<8x32xf32>
    %cst_12 = arith.constant dense<0.000000e+00> : vector<8xf32>
    %45 = vector.multi_reduction <add>, %44, %cst_12 [1] : vector<8x32xf32> to vector<8xf32>
    %46 = vector.shape_cast %45 : vector<8xf32> to vector<8x1xf32>
    %47 = arith.mulf %39, %40 : vector<8x32xf32>
    %cst_13 = arith.constant dense<0.000000e+00> : vector<8xf32>
    %48 = vector.multi_reduction <add>, %47, %cst_13 [1] : vector<8x32xf32> to vector<8xf32>
    %49 = vector.shape_cast %48 : vector<8xf32> to vector<8x1xf32>
    %50 = math.rsqrt %43 : vector<8x1xf32>
    %51 = arith.mulf %49, %50 : vector<8x1xf32>
    %cst_14 = arith.constant 9.99999996E-13 : f32
    %52 = vector.broadcast %cst_14 : f32 to vector<8x1xf32>
    %53 = arith.maximumf %46, %52 : vector<8x1xf32>
    %54 = math.rsqrt %53 : vector<8x1xf32>
    %55 = arith.mulf %51, %54 : vector<8x1xf32>
    %cst_15 = arith.constant 1.000000e+00 : f32
    %56 = vector.broadcast %cst_15 : f32 to vector<8x1xf32>
    %57 = arith.subf %56, %55 : vector<8x1xf32>
    %cst_16 = arith.constant 0.000000e+00 : f32
    %58 = vector.broadcast %cst_16 : f32 to vector<8x1xf32>
    %59 = arith.select %12, %57, %58 : vector<8x1xi1>, vector<8x1xf32>
    %60 = vector.shape_cast %59 : vector<8x1xf32> to vector<1x8x1xf32>
    %cst_17 = arith.constant dense<0.000000e+00> : vector<1xf32>
    %61 = vector.multi_reduction <add>, %60, %cst_17 [1, 2] : vector<1x8x1xf32> to vector<1xf32>
    %62 = vector.shape_cast %61 : vector<1xf32> to vector<1x1x1xf32>
    %63 = vector.extract %62[0, 0, 0] : f32 from vector<1x1x1xf32>
    %64 = arith.addf %38, %63 : f32
    %65 = vector.extract_strided_slice %3 {offsets = [0, 64], sizes = [8, 32], strides = [1, 1]} : vector<8x128xf32> to vector<8x32xf32>
    %66 = vector.extract_strided_slice %4 {offsets = [0, 64], sizes = [8, 32], strides = [1, 1]} : vector<8x128xf32> to vector<8x32xf32>
    %67 = arith.mulf %65, %65 : vector<8x32xf32>
    %cst_18 = arith.constant dense<0.000000e+00> : vector<8xf32>
    %68 = vector.multi_reduction <add>, %67, %cst_18 [1] : vector<8x32xf32> to vector<8xf32>
    %69 = vector.shape_cast %68 : vector<8xf32> to vector<8x1xf32>
    %70 = arith.mulf %66, %66 : vector<8x32xf32>
    %cst_19 = arith.constant dense<0.000000e+00> : vector<8xf32>
    %71 = vector.multi_reduction <add>, %70, %cst_19 [1] : vector<8x32xf32> to vector<8xf32>
    %72 = vector.shape_cast %71 : vector<8xf32> to vector<8x1xf32>
    %73 = arith.mulf %65, %66 : vector<8x32xf32>
    %cst_20 = arith.constant dense<0.000000e+00> : vector<8xf32>
    %74 = vector.multi_reduction <add>, %73, %cst_20 [1] : vector<8x32xf32> to vector<8xf32>
    %75 = vector.shape_cast %74 : vector<8xf32> to vector<8x1xf32>
    %76 = math.rsqrt %69 : vector<8x1xf32>
    %77 = arith.mulf %75, %76 : vector<8x1xf32>
    %cst_21 = arith.constant 9.99999996E-13 : f32
    %78 = vector.broadcast %cst_21 : f32 to vector<8x1xf32>
    %79 = arith.maximumf %72, %78 : vector<8x1xf32>
    %80 = math.rsqrt %79 : vector<8x1xf32>
    %81 = arith.mulf %77, %80 : vector<8x1xf32>
    %cst_22 = arith.constant 1.000000e+00 : f32
    %82 = vector.broadcast %cst_22 : f32 to vector<8x1xf32>
    %83 = arith.subf %82, %81 : vector<8x1xf32>
    %cst_23 = arith.constant 0.000000e+00 : f32
    %84 = vector.broadcast %cst_23 : f32 to vector<8x1xf32>
    %85 = arith.select %12, %83, %84 : vector<8x1xi1>, vector<8x1xf32>
    %86 = vector.shape_cast %85 : vector<8x1xf32> to vector<1x8x1xf32>
    %cst_24 = arith.constant dense<0.000000e+00> : vector<1xf32>
    %87 = vector.multi_reduction <add>, %86, %cst_24 [1, 2] : vector<1x8x1xf32> to vector<1xf32>
    %88 = vector.shape_cast %87 : vector<1xf32> to vector<1x1x1xf32>
    %89 = vector.extract %88[0, 0, 0] : f32 from vector<1x1x1xf32>
    %90 = arith.addf %64, %89 : f32
    %91 = vector.extract_strided_slice %3 {offsets = [0, 96], sizes = [8, 32], strides = [1, 1]} : vector<8x128xf32> to vector<8x32xf32>
    %92 = vector.extract_strided_slice %4 {offsets = [0, 96], sizes = [8, 32], strides = [1, 1]} : vector<8x128xf32> to vector<8x32xf32>
    %93 = arith.mulf %91, %91 : vector<8x32xf32>
    %cst_25 = arith.constant dense<0.000000e+00> : vector<8xf32>
    %94 = vector.multi_reduction <add>, %93, %cst_25 [1] : vector<8x32xf32> to vector<8xf32>
    %95 = vector.shape_cast %94 : vector<8xf32> to vector<8x1xf32>
    %96 = arith.mulf %92, %92 : vector<8x32xf32>
    %cst_26 = arith.constant dense<0.000000e+00> : vector<8xf32>
    %97 = vector.multi_reduction <add>, %96, %cst_26 [1] : vector<8x32xf32> to vector<8xf32>
    %98 = vector.shape_cast %97 : vector<8xf32> to vector<8x1xf32>
    %99 = arith.mulf %91, %92 : vector<8x32xf32>
    %cst_27 = arith.constant dense<0.000000e+00> : vector<8xf32>
    %100 = vector.multi_reduction <add>, %99, %cst_27 [1] : vector<8x32xf32> to vector<8xf32>
    %101 = vector.shape_cast %100 : vector<8xf32> to vector<8x1xf32>
    %102 = math.rsqrt %95 : vector<8x1xf32>
    %103 = arith.mulf %101, %102 : vector<8x1xf32>
    %cst_28 = arith.constant 9.99999996E-13 : f32
    %104 = vector.broadcast %cst_28 : f32 to vector<8x1xf32>
    %105 = arith.maximumf %98, %104 : vector<8x1xf32>
    %106 = math.rsqrt %105 : vector<8x1xf32>
    %107 = arith.mulf %103, %106 : vector<8x1xf32>
    %cst_29 = arith.constant 1.000000e+00 : f32
    %108 = vector.broadcast %cst_29 : f32 to vector<8x1xf32>
    %109 = arith.subf %108, %107 : vector<8x1xf32>
    %cst_30 = arith.constant 0.000000e+00 : f32
    %110 = vector.broadcast %cst_30 : f32 to vector<8x1xf32>
    %111 = arith.select %12, %109, %110 : vector<8x1xi1>, vector<8x1xf32>
    %112 = vector.shape_cast %111 : vector<8x1xf32> to vector<1x8x1xf32>
    %cst_31 = arith.constant dense<0.000000e+00> : vector<1xf32>
    %113 = vector.multi_reduction <add>, %112, %cst_31 [1, 2] : vector<1x8x1xf32> to vector<1xf32>
    %114 = vector.shape_cast %113 : vector<1xf32> to vector<1x1x1xf32>
    %115 = vector.extract %114[0, 0, 0] : f32 from vector<1x1x1xf32>
    %116 = arith.addf %90, %115 : f32
    %c0_32 = arith.constant 0 : index
    %c0_33 = arith.constant 0 : index
    %c0_34 = arith.constant 0 : index
    %117 = vector.load %arg4[%c0_32, %c0_33, %c0_34] : memref<1x8x128xf32, #tpu.memory_space<vmem>>, vector<1x8x128xf32>
    %118 = vector.broadcast %116 : f32 to vector<1x8x128xf32>
    %119 = arith.addf %117, %118 : vector<1x8x128xf32>
    %c0_35 = arith.constant 0 : index
    %c0_36 = arith.constant 0 : index
    %c0_37 = arith.constant 0 : index
    %120 = vector.load %arg4[%c0_35, %c0_36, %c0_37] : memref<1x8x128xf32, #tpu.memory_space<vmem>>, vector<1x8x128xf32>
    tpu.vector_store %arg4[%c0_35, %c0_36, %c0_37], %119 {strides = array<i32>} : memref<1x8x128xf32, #tpu.memory_space<vmem>>, vector<1x8x128xf32>,
    return
  }
  func.func @transform_0(%arg0: i32, %arg1: i32) -> (i32, i32) {
    %c1_i32 = arith.constant 1 : i32
    %0 = arith.muli %arg0, %c1_i32 : i32
    %1 = arith.addi %0, %arg1 : i32
    %c0_i32 = arith.constant 0 : i32
    %c0_i32_0 = arith.constant 0 : i32
    return %1, %c0_i32 : i32, i32
  }
  func.func @transform_1(%arg0: i32, %arg1: i32) -> (i32, i32) {
    %c1_i32 = arith.constant 1 : i32
    %0 = arith.muli %arg0, %c1_i32 : i32
    %1 = arith.addi %0, %arg1 : i32
    %c0_i32 = arith.constant 0 : i32
    %c0_i32_0 = arith.constant 0 : i32
    return %1, %c0_i32 : i32, i32
  }
  func.func @transform_2(%arg0: i32, %arg1: i32) -> (i32, i32, i32) {
    %c0_i32 = arith.constant 0 : i32
    %c0_i32_0 = arith.constant 0 : i32
    %c0_i32_1 = arith.constant 0 : i32
    return %arg0, %c0_i32, %c0_i32_0 : i32, i32, i32
  }
}

</mosaic_0001>

<llo_original>
// kernel: tpu_custom_call.1
$region0: #{tpu_custom_call.1}
  #allocation0 [shape = 'u32[]', space=smem, size = 0x4, offset = 0x4, fixed_abs, tag = 'smem constant byte address 0x4 - core index']
  #allocation1 [shape = 'u32[144,128]{1,0:T(1,128)}', space=vmem, size = 0x12000, scoped, tag = 'internal scratch']
  %s0 = inlined_call_operand.hbm [shape: f32[2,128], index: 0, kind: input, shape index: {}]
  %s1 = inlined_call_operand.vmem [shape: f32[2,128], index: 1, kind: input, shape index: {}]
  %s2 = inlined_call_operand.hbm [shape: f32[1,8,128], index: 2, kind: output, shape index: {}]
  %s3 = sld [smem:[#allocation0]]
  $region26: #{tpu_custom_call.1} parent=0
    _
  %s5 = ssub.s32 1, %s3
  %s6 = scalar_select 0, %s5, %s3
  $region1: #{tpu_custom_call.1} parent=0
    #allocation2 [shape = 'u8[4096]{0}', space=vmem, size = 0x1000, scoped, tag = 'input window, operand 0, single buffered']
    #allocation3 [shape = 's32[1]{0}', space=sflag, size = 0x4, scoped, tag = 'scoped memory for tpu_custom_call.1']
    #allocation4 [shape = 's32[1]{0}', space=sflag, size = 0x4, scoped, tag = 'scoped memory for tpu_custom_call.1']
    #allocation5 [shape = 'u8[4096]{0}', space=vmem, size = 0x1000, scoped, tag = 'output window, operand 0, single buffered']
    %7 = vsyncpa [#allocation3], 0
    %8 = vsyncpa [#allocation4], 0
    // Predicated region
    $region2: #{tpu_custom_call.1} parent=1 // pred_check
      _
    $region3: #{tpu_custom_call.1} parent=1 // pred_check_branch
      %10 = sbr.rel (0) target = $region5
    $region4: #{tpu_custom_call.1} parent=1 // pred_region
      %s11 = sadd.s32 0, 0
      %s12 = smul.u32 4, %s11
      %s13 = ssub.s32 1, %s12
      %s14 = smul.u32 32, %s13
      %s16 = ssub.s32 128, %s14
      %17 = vsyncadd [#allocation3], %s16
      %p18 = scmp.ne.s32.totalorder 0, %s14
      %s19 = smul.addr %s12, 32
      %s20 = scalar_lea.hbm %s0, %s19
      %s21 = smul.u32 2, %s13
      %s22 = sshll.u32 [#allocation2], 4
      %s23 = int_to_ptr.vmem [resolvable:$true] %s22
      %s24 = sshll.u32 %s21, 4
      %28 = dma.hbm_to_vmem [thread:$0]  (%p18), %s20, %s24, %s23, [#allocation3], 32, 32, 2
    $region5: #{tpu_custom_call.1} parent=1 // pred_fallthru
      _
    // Predicated region
    $region6: #{tpu_custom_call.1} parent=1 // pred_check
      _
    $region7: #{tpu_custom_call.1} parent=1 // pred_check_branch
      %30 = sbr.rel (0) target = $region9
    $region8: #{tpu_custom_call.1} parent=1 // pred_region
      %s31 = sadd.s32 0, 0
      %s32 = smul.u32 4, %s31
      %s33 = ssub.s32 1, %s32
      %s34 = smul.u32 32, %s33
      %p35 = scmp.lt.s32.totalorder %s32, 0
      %s36 = scalar_select %p35, %s32, 0
      %s37 = smul.addr %s36, 2
      %s38 = scalar_lea.vmem %s1, %s37
      %s39 = sadd.s32 0, 0
      %s40 = smul.u32 4, %s39
      %s41 = ssub.s32 1, %s40
      %s42 = smul.u32 32, %s41
    $region9: #{tpu_custom_call.1} parent=1 // pred_fallthru
      _
    // Predicated region
    $region10: #{tpu_custom_call.1} parent=1 // pred_check
      _
    $region11: #{tpu_custom_call.1} parent=1 // pred_check_branch
      %44 = sbr.rel (0) target = $region13
    $region12: #{tpu_custom_call.1} parent=1 // pred_region
      %45 = dma.done [#allocation3], 128
    $region13: #{tpu_custom_call.1} parent=1 // pred_fallthru
      _
    %s46 = sadd.s32 0, 0
    %s47 = smul.u32 4, %s46
    %s48 = ssub.s32 1, %s47
    %s49 = smul.u32 32, %s48
    %p50 = scmp.lt.s32.totalorder %s47, 0
    %s51 = scalar_select %p50, %s47, 0
    %s52 = smul.addr %s51, 2
    %s53 = scalar_lea.vmem %s1, %s52
    %s54 = sadd.s32 0, 0
    %s55 = smul.u32 4, %s54
    %s56 = ssub.s32 1, %s55
    %s57 = smul.u32 32, %s56
    %s58 = sadd.s32 0, 0
    %s59 = smul.u32 4, %s58
    %s60 = ssub.s32 1, %s59
    %s61 = smul.u32 32, %s60
    %p62 = scmp.lt.s32.totalorder %s59, 0
    %s63 = scalar_select %p62, %s59, 0
    %s64 = smul.addr %s63, 2
    %s65 = scalar_lea.vmem %s1, %s64
    %s66 = sadd.s32 0, 0
    %s67 = smul.u32 4, %s66
    %s68 = ssub.s32 1, %s67
    %s69 = smul.u32 32, %s68
    %p70 = scmp.eq.s32.totalorder 0, 0
    // Predicated region
    $region14: #{tpu_custom_call.1} parent=1 // pred_check
      %p71 = pneg %p70
    $region15: #{tpu_custom_call.1} parent=1 // pred_check_branch
      %73 = sbr.rel (%p71) target = $region17
    $region16: #{tpu_custom_call.1} parent=1 // pred_region
      %74 = vst [vmem:[#allocation5] sm:$0xff] 0.0
    $region17: #{tpu_custom_call.1} parent=1 // pred_fallthru
      _
    %v75 = vld [vmem:[#allocation2] sm:$0xff]
    %v76 = vld [vmem:[%s65] sm:$0xff]
    %s77 = sadd.s32 0, 0
    %s78 = smul.u32 %s77, 8
    %v79 = vlaneseq
    %v80 = vshrl.u32 %v79, 7
    %v81 = vstv %s78
    %v82 = vadd.s32 %v81, %v80
    %vm83 = vcmp.lt.s32.totalorder %v82, 2
    %v84 = vmul.f32 %v75, %v75
    %vm85 = vcmask 261120
    %v86 = vsel %vm85, %v84, 0.0
    %87 = vadd.xlane.f32.xlu0 %v86
    %v88 = vpop.xlane.xlu0 %87
    %v89 = vmul.f32 %v76, %v76
    %v90 = vsel %vm85, %v89, 0.0
    %91 = vadd.xlane.f32.xlu0 %v90
    %v92 = vpop.xlane.xlu0 %91
    %v93 = vmul.f32 %v75, %v76
    %v94 = vsel %vm85, %v93, 0.0
    %95 = vadd.xlane.f32.xlu0 %v94
    %v96 = vpop.xlane.xlu0 %95
    %v97 = vrsqrt.pop %v88
    %v98 = vmul.f32 %v96, %v97
    %v99 = vmax.f32 %v92, 1e-12
    %v100 = vrsqrt.pop %v99
    %v101 = vmul.f32 %v98, %v100
    %v102 = vsub.f32 1.0, %v101
    %v103 = vsel %vm83, %v102, 0.0
    %vm104 = vcmask 7168
    %v105 = vsel %vm104, %v103, 0.0
    %106 = vadd.xlane.f32.xlu0 %v105
    %v107 = vpop.xlane.xlu0 %106
    %v108 = vrot.slane %v107, 4
    %v109 = vadd.f32 %v107, %v108
    %v110 = vrot.slane %v109, 2
    %v111 = vadd.f32 %v109, %v110
    %v112 = vrot.slane %v111, 1
    %v113 = vadd.f32 %v111, %v112
    %s114 = vtos %v113
    %s115 = sadd.f32 %s114, 0.0
    %117 = vrot.lane.b32.xlu0 %v84, 96
    %v118 = vpop.permute.xlu0 %117
    %v120 = vsel %vm85, %v118, 0.0
    %121 = vadd.xlane.f32.xlu0 %v120
    %v122 = vpop.xlane.xlu0 %121
    %124 = vrot.lane.b32.xlu0 %v89, 96
    %v125 = vpop.permute.xlu0 %124
    %v127 = vsel %vm85, %v125, 0.0
    %128 = vadd.xlane.f32.xlu0 %v127
    %v129 = vpop.xlane.xlu0 %128
    %131 = vrot.lane.b32.xlu0 %v93, 96
    %v132 = vpop.permute.xlu0 %131
    %v134 = vsel %vm85, %v132, 0.0
    %135 = vadd.xlane.f32.xlu0 %v134
    %v136 = vpop.xlane.xlu0 %135
    %v137 = vrsqrt.pop %v122
    %v138 = vmul.f32 %v136, %v137
    %v139 = vmax.f32 %v129, 1e-12
    %v140 = vrsqrt.pop %v139
    %v141 = vmul.f32 %v138, %v140
    %v142 = vsub.f32 1.0, %v141
    %v143 = vsel %vm83, %v142, 0.0
    %v144 = vsel %vm104, %v143, 0.0
    %145 = vadd.xlane.f32.xlu0 %v144
    %v146 = vpop.xlane.xlu0 %145
    %v147 = vrot.slane %v146, 4
    %v148 = vadd.f32 %v146, %v147
    %v149 = vrot.slane %v148, 2
    %v150 = vadd.f32 %v148, %v149
    %v151 = vrot.slane %v150, 1
    %v152 = vadd.f32 %v150, %v151
    %s153 = vtos %v152
    %s154 = sadd.f32 %s115, %s153
    %155 = vrot.lane.b32.xlu0 %v84, 64
    %v156 = vpop.permute.xlu0 %155
    %v158 = vsel %vm85, %v156, 0.0
    %159 = vadd.xlane.f32.xlu0 %v158
    %v160 = vpop.xlane.xlu0 %159
    %161 = vrot.lane.b32.xlu0 %v89, 64
    %v162 = vpop.permute.xlu0 %161
    %v164 = vsel %vm85, %v162, 0.0
    %165 = vadd.xlane.f32.xlu0 %v164
    %v166 = vpop.xlane.xlu0 %165
    %167 = vrot.lane.b32.xlu0 %v93, 64
    %v168 = vpop.permute.xlu0 %167
    %v170 = vsel %vm85, %v168, 0.0
    %171 = vadd.xlane.f32.xlu0 %v170
    %v172 = vpop.xlane.xlu0 %171
    %v173 = vrsqrt.pop %v160
    %v174 = vmul.f32 %v172, %v173
    %v175 = vmax.f32 %v166, 1e-12
    %v176 = vrsqrt.pop %v175
    %v177 = vmul.f32 %v174, %v176
    %v178 = vsub.f32 1.0, %v177
    %v179 = vsel %vm83, %v178, 0.0
    %v180 = vsel %vm104, %v179, 0.0
    %181 = vadd.xlane.f32.xlu0 %v180
    %v182 = vpop.xlane.xlu0 %181
    %v183 = vrot.slane %v182, 4
    %v184 = vadd.f32 %v182, %v183
    %v185 = vrot.slane %v184, 2
    %v186 = vadd.f32 %v184, %v185
    %v187 = vrot.slane %v186, 1
    %v188 = vadd.f32 %v186, %v187
    %s189 = vtos %v188
    %s190 = sadd.f32 %s154, %s189
    %191 = vrot.lane.b32.xlu0 %v84, 32
    %v192 = vpop.permute.xlu0 %191
    %v194 = vsel %vm85, %v192, 0.0
    %195 = vadd.xlane.f32.xlu0 %v194
    %v196 = vpop.xlane.xlu0 %195
    %197 = vrot.lane.b32.xlu0 %v89, 32
    %v198 = vpop.permute.xlu0 %197
    %v200 = vsel %vm85, %v198, 0.0
    %201 = vadd.xlane.f32.xlu0 %v200
    %v202 = vpop.xlane.xlu0 %201
    %203 = vrot.lane.b32.xlu0 %v93, 32
    %v204 = vpop.permute.xlu0 %203
    %v206 = vsel %vm85, %v204, 0.0
    %207 = vadd.xlane.f32.xlu0 %v206
    %v208 = vpop.xlane.xlu0 %207
    %v209 = vrsqrt.pop %v196
    %v210 = vmul.f32 %v208, %v209
    %v211 = vmax.f32 %v202, 1e-12
    %v212 = vrsqrt.pop %v211
    %v213 = vmul.f32 %v210, %v212
    %v214 = vsub.f32 1.0, %v213
    %v215 = vsel %vm83, %v214, 0.0
    %v216 = vsel %vm104, %v215, 0.0
    %217 = vadd.xlane.f32.xlu0 %v216
    %v218 = vpop.xlane.xlu0 %217
    %v219 = vrot.slane %v218, 4
    %v220 = vadd.f32 %v218, %v219
    %v221 = vrot.slane %v220, 2
    %v222 = vadd.f32 %v220, %v221
    %v223 = vrot.slane %v222, 1
    %v224 = vadd.f32 %v222, %v223
    %s225 = vtos %v224
    %s226 = sadd.f32 %s190, %s225
    %v227 = vld [vmem:[#allocation5] sm:$0xff]
    %v228 = vstv %s226
    %v229 = vadd.f32 %v227, %v228
    %230 = vst [vmem:[#allocation5] sm:$0xff] %v229
    // Predicated region
    $region18: #{tpu_custom_call.1} parent=1 // pred_check
      _
    $region19: #{tpu_custom_call.1} parent=1 // pred_check_branch
      %232 = sbr.rel (0) target = $region21
    $region20: #{tpu_custom_call.1} parent=1 // pred_region
      %s234 = ssub.s32 128, 128
      %235 = vsyncadd [#allocation4], %s234
      %s237 = sshll.u32 [#allocation5], 4
      %s238 = int_to_ptr.vmem [resolvable:$true] %s237
      %240 = dma.vmem_to_hbm [thread:$0]  %s238, 128, %s2, [#allocation4]
    $region21: #{tpu_custom_call.1} parent=1 // pred_fallthru
      _
    // Predicated region
    $region22: #{tpu_custom_call.1} parent=1 // pred_check
      _
    $region23: #{tpu_custom_call.1} parent=1 // pred_check_branch
      %242 = sbr.rel (0) target = $region25
    $region24: #{tpu_custom_call.1} parent=1 // pred_region
      %243 = dma.done [#allocation4], 128
    $region25: #{tpu_custom_call.1} parent=1 // pred_fallthru
      _
    %244 = vsyncpa [#allocation3], 1
    %245 = vsyncpa [#allocation4], 1

</llo_original>
